<compile_context>
chip_gen: v7x
topology: tpu7x:2x2x1
jax: 0.10.0
libtpu: 0.0.40
codegen_flags: <defaults>
</compile_context>

<pallas_src>
import functools

import jax
import jax.numpy as jnp
from jax.experimental import pallas as pl
from jax.experimental.pallas import tpu as pltpu


# -----------------------------------------------------------------------------
# Fused kernel:
#   grid = (N // TN, MT // TMT), semantics ("parallel", "arbitrary")
#   per (n, t): xsum[TN, J*C] += sum over the TMT chunk of x
#   at t == last:
#       px   = xsum / MT                          (pooled input,  TN x J*C)
#       rep  = px @ Wb_blockdiag + bb_tiled        (pooled backbone rep, TN x J*D)
#       h    = relu(rep @ W1 + b1)                 (TN x H)
#       out  = h @ W2_pad + b2_pad                 (TN x 128, lane-dense)
# -----------------------------------------------------------------------------
def _fused_kernel(x_ref, wbb_ref, bbb_ref, w1_ref, b1_ref, w2_ref, b2_ref,
                  out_ref, xsum_ref, *, inv_mt):
    t = pl.program_id(1)

    @pl.when(t == 0)
    def _():
        xsum_ref[...] = jnp.zeros_like(xsum_ref)

    # Streamed (M,T) pooling: sublane reduction of the current MT chunk.
    xsum_ref[...] += jnp.sum(x_ref[...], axis=1)

    @pl.when(t == pl.num_programs(1) - 1)
    def _():
        px = xsum_ref[...] * inv_mt                               # (TN, J*C)
        # Shared per-joint Linear(C->D) applied via a block-diagonal weight so
        # the result lands directly in the flattened (TN, J*D) layout fc1 expects
        # (no in-kernel reshape, no K=3 per-row MXU matmul).
        rep = jnp.dot(px, wbb_ref[...],
                      preferred_element_type=jnp.float32) + bbb_ref[...]
        h = jnp.dot(rep, w1_ref[...],
                    preferred_element_type=jnp.float32) + b1_ref[...]
        h = jnp.maximum(h, 0.0)                                   # ReLU (dropout p=0.0 is identity)
        logits = jnp.dot(h, w2_ref[...],
                         preferred_element_type=jnp.float32) + b2_ref[...]
        out_ref[0] = logits.astype(out_ref.dtype)                 # (TN, 128) lane-dense store


# -----------------------------------------------------------------------------
# WalkingNet forward: glue / static weight preprocessing in JAX, compute in Pallas.
# -----------------------------------------------------------------------------
def walking_net_forward(x, params, lanes=128):
    """x: (N, M, T, J, C) float32  ->  logits (N, num_classes)."""
    N, M, T, J, C = x.shape
    D = params["wb"].shape[1]
    H = params["w1"].shape[1]
    K = params["w2"].shape[1]
    MT, JC, JD = M * T, J * C, J * D
    KP = max(lanes, ((K + lanes - 1) // lanes) * lanes)           # lane-dense logits width

    # Row tiles: full-sublane batch tiles when possible, else 1-row tiles so the
    # batch axis still forms a real "parallel" grid (v7x megacore sharding).
    TN = 8 if N % 8 == 0 else 1
    TMT = 8 if MT % 8 == 0 else MT
    n_tiles, mt_tiles = N // TN, MT // TMT

    x2 = x.reshape(N, MT, JC)

    # Static weight preprocessing (wrapper-side, once per call):
    #  - block-diagonal expansion of the shared per-joint projection,
    #  - zero-pad fc2 to 128 output lanes for unmasked stores.
    wb_big = jnp.kron(jnp.eye(J, dtype=jnp.float32), params["wb"])    # (J*C, J*D)
    bb_big = jnp.tile(params["bb"], (1, J))                            # (1, J*D)
    w2p = jnp.zeros((H, KP), jnp.float32).at[:, :K].set(params["w2"])  # (H, 128)
    b2p = jnp.zeros((1, KP), jnp.float32).at[:, :K].set(params["b2"])  # (1, 128)

    kernel = functools.partial(_fused_kernel, inv_mt=1.0 / MT)

    out = pl.pallas_call(
        kernel,
        out_shape=jax.ShapeDtypeStruct((n_tiles, TN, KP), jnp.float32),
        grid_spec=pltpu.PrefetchScalarGridSpec(
            num_scalar_prefetch=0,
            grid=(n_tiles, mt_tiles),
            in_specs=[
                pl.BlockSpec((TN, TMT, JC), lambda n, t: (n, t, 0)),   # streamed x tiles
                pl.BlockSpec((JC, JD), lambda n, t: (0, 0)),           # weights stay resident
                pl.BlockSpec((1, JD), lambda n, t: (0, 0)),
                pl.BlockSpec((JD, H), lambda n, t: (0, 0)),
                pl.BlockSpec((1, H), lambda n, t: (0, 0)),
                pl.BlockSpec((H, KP), lambda n, t: (0, 0)),
                pl.BlockSpec((1, KP), lambda n, t: (0, 0)),
            ],
            out_specs=pl.BlockSpec((1, TN, KP), lambda n, t: (n, 0, 0)),
            scratch_shapes=[pltpu.VMEM((TN, JC), jnp.float32)],        # pooled-x accumulator
        ),
        compiler_params=pltpu.CompilerParams(
            dimension_semantics=("parallel", "arbitrary")),
    )(x2, wb_big, bb_big, params["w1"], params["b1"], w2p, b2p)

    return out.reshape(N, KP)[:, :K]


def init_params(key, dim_rep, num_joints, hidden_dim, num_classes, c_in=3):
    ks = jax.random.split(key, 6)

    def unif(k, shape, fan_in):
        bound = 1.0 / jnp.sqrt(fan_in)
        return jax.random.uniform(k, shape, jnp.float32, -bound, bound)

    jd = dim_rep * num_joints
    return {
        "wb": unif(ks[0], (c_in, dim_rep), c_in),                      # synthetic backbone
        "bb": unif(ks[1], (1, dim_rep), c_in),
        "w1": unif(ks[2], (jd, hidden_dim), jd),                       # fc1.weight^T
        "b1": unif(ks[3], (1, hidden_dim), jd),
        "w2": unif(ks[4], (hidden_dim, num_classes), hidden_dim),      # fc2.weight^T
        "b2": unif(ks[5], (1, num_classes), hidden_dim),
    }


def reference_forward(x, params):
    """Pure-JAX reference mirroring the PyTorch code path (project-then-pool)."""
    N, M, T, J, C = x.shape
    rep = x.reshape(N * M * T * J, C) @ params["wb"] + params["bb"]
    feat = rep.reshape(N, M, T, J, -1)
    feat = jnp.transpose(feat, (0, 1, 3, 4, 2))            # (N, M, J, D, T)
    feat = feat.mean(axis=-1)                              # (N, M, J, D)
    feat = feat.reshape(N, M, -1)                          # (N, M, J*D)
    feat = feat.mean(axis=1)                               # (N, J*D)
    h = jnp.maximum(feat @ params["w1"] + params["b1"], 0.0)
    return h @ params["w2"] + params["b2"]


if __name__ == "__main__":
    # Small shapes consistent with the module: (N, M, T, J, C) = (2, 2, 8, 17, 3)
    N, M, T, J, C = 2, 2, 8, 17, 3
    dim_rep, hidden_dim, num_classes = 32, 64, 2

    key = jax.random.PRNGKey(0)
    kx, kp = jax.random.split(key)
    x = jax.random.normal(kx, (N, M, T, J, C), dtype=jnp.float32)
    params = init_params(kp, dim_rep, J, hidden_dim, num_classes, c_in=C)

    out = walking_net_forward(x, params)
    out = jax.block_until_ready(out)

    ref = reference_forward(x, params)
    assert out.shape == (N, num_classes), out.shape
    assert jnp.allclose(out, ref, atol=1e-3, rtol=1e-3), (out, ref)

    print("KERNEL_OK")
</pallas_src>

<mosaic_0001>
module attributes {stable_mosaic.version = 11 : i64} {
  func.func @_fused_kernel(%arg0: i32, %arg1: i32, %arg2: memref<1x8x51xf32, #tpu.memory_space<vmem>>, %arg3: memref<51x544xf32, #tpu.memory_space<vmem>>, %arg4: memref<1x544xf32, #tpu.memory_space<vmem>>, %arg5: memref<544x64xf32, #tpu.memory_space<vmem>>, %arg6: memref<1x64xf32, #tpu.memory_space<vmem>>, %arg7: memref<64x128xf32, #tpu.memory_space<vmem>>, %arg8: memref<1x128xf32, #tpu.memory_space<vmem>>, %arg9: memref<1x1x128xf32, #tpu.memory_space<vmem>>, %arg10: memref<1x51xf32, #tpu.memory_space<vmem>>) attributes {dimension_semantics = [#tpu.dimension_semantics<parallel>, #tpu.dimension_semantics<arbitrary>], iteration_bounds = array<i64: 2, 2>, scalar_prefetch = 0 : i64, scratch_operands = 1 : i64, tpu.core_type = #tpu.core_type<tc>, window_params = [{transform_indices = @transform_0, window_bounds = array<i64: 1, 8, 51>}, {pipeline_mode = #tpu.pipeline_mode<synchronous>, transform_indices = @transform_1, window_bounds = array<i64: 51, 544>}, {pipeline_mode = #tpu.pipeline_mode<synchronous>, transform_indices = @transform_2, window_bounds = array<i64: 1, 544>}, {pipeline_mode = #tpu.pipeline_mode<synchronous>, transform_indices = @transform_3, window_bounds = array<i64: 544, 64>}, {pipeline_mode = #tpu.pipeline_mode<synchronous>, transform_indices = @transform_4, window_bounds = array<i64: 1, 64>}, {pipeline_mode = #tpu.pipeline_mode<synchronous>, transform_indices = @transform_5, window_bounds = array<i64: 64, 128>}, {pipeline_mode = #tpu.pipeline_mode<synchronous>, transform_indices = @transform_6, window_bounds = array<i64: 1, 128>}, {transform_indices = @transform_7, window_bounds = array<i64: 1, 1, 128>}]} {
    %c0_i32 = arith.constant 0 : i32
    %0 = arith.cmpi eq, %arg1, %c0_i32 : i32
    %1 = arith.extui %0 : i1 to i32
    %c0_i32_0 = arith.constant 0 : i32
    %2 = arith.cmpi ne, %1, %c0_i32_0 : i32
    scf.if %2 {
      %cst_8 = arith.constant 0.000000e+00 : f32
      %11 = vector.broadcast %cst_8 : f32 to vector<1x51xf32>
      %c0_9 = arith.constant 0 : index
      %c0_10 = arith.constant 0 : index
      %12 = vector.load %arg10[%c0_9, %c0_10] : memref<1x51xf32, #tpu.memory_space<vmem>>, vector<1x51xf32>
      tpu.vector_store %arg10[%c0_9, %c0_10], %11 {strides = array<i32>} : memref<1x51xf32, #tpu.memory_space<vmem>>, vector<1x51xf32>,
    } else {
    }
    %c0 = arith.constant 0 : index
    %c0_1 = arith.constant 0 : index
    %3 = vector.load %arg10[%c0, %c0_1] : memref<1x51xf32, #tpu.memory_space<vmem>>, vector<1x51xf32>
    %c0_2 = arith.constant 0 : index
    %c0_3 = arith.constant 0 : index
    %c0_4 = arith.constant 0 : index
    %4 = vector.load %arg2[%c0_2, %c0_3, %c0_4] : memref<1x8x51xf32, #tpu.memory_space<vmem>>, vector<1x8x51xf32>
    %cst = arith.constant dense<0.000000e+00> : vector<1x51xf32>
    %5 = vector.multi_reduction <add>, %4, %cst [1] : vector<1x8x51xf32> to vector<1x51xf32>
    %6 = arith.addf %3, %5 : vector<1x51xf32>
    %c0_5 = arith.constant 0 : index
    %c0_6 = arith.constant 0 : index
    %7 = vector.load %arg10[%c0_5, %c0_6] : memref<1x51xf32, #tpu.memory_space<vmem>>, vector<1x51xf32>
    tpu.vector_store %arg10[%c0_5, %c0_6], %6 {strides = array<i32>} : memref<1x51xf32, #tpu.memory_space<vmem>>, vector<1x51xf32>,
    %c1_i32 = arith.constant 1 : i32
    %8 = arith.cmpi eq, %arg1, %c1_i32 : i32
    %9 = arith.extui %8 : i1 to i32
    %c0_i32_7 = arith.constant 0 : i32
    %10 = arith.cmpi ne, %9, %c0_i32_7 : i32
    scf.if %10 {
      %c0_8 = arith.constant 0 : index
      %c0_9 = arith.constant 0 : index
      %11 = vector.load %arg10[%c0_8, %c0_9] : memref<1x51xf32, #tpu.memory_space<vmem>>, vector<1x51xf32>
      %cst_10 = arith.constant 6.250000e-02 : f32
      %12 = vector.broadcast %cst_10 : f32 to vector<1x51xf32>
      %13 = arith.mulf %11, %12 : vector<1x51xf32>
      %c0_11 = arith.constant 0 : index
      %c0_12 = arith.constant 0 : index
      %14 = vector.load %arg3[%c0_11, %c0_12] : memref<51x544xf32, #tpu.memory_space<vmem>>, vector<51x544xf32>
      %cst_13 = arith.constant dense<0.000000e+00> : vector<1x544xf32>
      %15 = tpu.matmul %13, %14, %cst_13 {dimension_numbers = #tpu.dot_dimension_numbers<[1], [0], [0], [1], [0, 0, 1, 1], [], []>} : vector<1x51xf32>, vector<51x544xf32>, vector<1x544xf32> -> vector<1x544xf32>
      %c0_14 = arith.constant 0 : index
      %c0_15 = arith.constant 0 : index
      %16 = vector.load %arg4[%c0_14, %c0_15] : memref<1x544xf32, #tpu.memory_space<vmem>>, vector<1x544xf32>
      %17 = arith.addf %15, %16 : vector<1x544xf32>
      %c0_16 = arith.constant 0 : index
      %c0_17 = arith.constant 0 : index
      %18 = vector.load %arg5[%c0_16, %c0_17] : memref<544x64xf32, #tpu.memory_space<vmem>>, vector<544x64xf32>
      %cst_18 = arith.constant dense<0.000000e+00> : vector<1x64xf32>
      %19 = tpu.matmul %17, %18, %cst_18 {dimension_numbers = #tpu.dot_dimension_numbers<[1], [0], [0], [1], [0, 0, 1, 1], [], []>} : vector<1x544xf32>, vector<544x64xf32>, vector<1x64xf32> -> vector<1x64xf32>
      %c0_19 = arith.constant 0 : index
      %c0_20 = arith.constant 0 : index
      %20 = vector.load %arg6[%c0_19, %c0_20] : memref<1x64xf32, #tpu.memory_space<vmem>>, vector<1x64xf32>
      %21 = arith.addf %19, %20 : vector<1x64xf32>
      %cst_21 = arith.constant 0.000000e+00 : f32
      %22 = vector.broadcast %cst_21 : f32 to vector<1x64xf32>
      %23 = arith.maximumf %21, %22 : vector<1x64xf32>
      %c0_22 = arith.constant 0 : index
      %c0_23 = arith.constant 0 : index
      %24 = vector.load %arg7[%c0_22, %c0_23] : memref<64x128xf32, #tpu.memory_space<vmem>>, vector<64x128xf32>
      %cst_24 = arith.constant dense<0.000000e+00> : vector<1x128xf32>
      %25 = tpu.matmul %23, %24, %cst_24 {dimension_numbers = #tpu.dot_dimension_numbers<[1], [0], [0], [1], [0, 0, 1, 1], [], []>} : vector<1x64xf32>, vector<64x128xf32>, vector<1x128xf32> -> vector<1x128xf32>
      %c0_25 = arith.constant 0 : index
      %c0_26 = arith.constant 0 : index
      %26 = vector.load %arg8[%c0_25, %c0_26] : memref<1x128xf32, #tpu.memory_space<vmem>>, vector<1x128xf32>
      %27 = arith.addf %25, %26 : vector<1x128xf32>
      %c0_27 = arith.constant 0 : index
      %c0_28 = arith.constant 0 : index
      %c0_29 = arith.constant 0 : index
      %28 = vector.load %arg9[%c0_27, %c0_28, %c0_29] : memref<1x1x128xf32, #tpu.memory_space<vmem>>, vector<1x1x128xf32>
      %29 = vector.shape_cast %28 : vector<1x1x128xf32> to vector<1x128xf32>
      %30 = vector.shape_cast %27 : vector<1x128xf32> to vector<1x1x128xf32>
      tpu.vector_store %arg9[%c0_27, %c0_28, %c0_29], %30 {strides = array<i32>} : memref<1x1x128xf32, #tpu.memory_space<vmem>>, vector<1x1x128xf32>,
    } else {
    }
    return
  }
  func.func @transform_0(%arg0: i32, %arg1: i32) -> (i32, i32, i32) {
    %c0_i32 = arith.constant 0 : i32
    %c0_i32_0 = arith.constant 0 : i32
    return %arg0, %arg1, %c0_i32 : i32, i32, i32
  }
  func.func @transform_1(%arg0: i32, %arg1: i32) -> (i32, i32) {
    %c0_i32 = arith.constant 0 : i32
    %c0_i32_0 = arith.constant 0 : i32
    %c0_i32_1 = arith.constant 0 : i32
    return %c0_i32, %c0_i32_0 : i32, i32
  }
  func.func @transform_2(%arg0: i32, %arg1: i32) -> (i32, i32) {
    %c0_i32 = arith.constant 0 : i32
    %c0_i32_0 = arith.constant 0 : i32
    %c0_i32_1 = arith.constant 0 : i32
    return %c0_i32, %c0_i32_0 : i32, i32
  }
  func.func @transform_3(%arg0: i32, %arg1: i32) -> (i32, i32) {
    %c0_i32 = arith.constant 0 : i32
    %c0_i32_0 = arith.constant 0 : i32
    %c0_i32_1 = arith.constant 0 : i32
    return %c0_i32, %c0_i32_0 : i32, i32
  }
  func.func @transform_4(%arg0: i32, %arg1: i32) -> (i32, i32) {
    %c0_i32 = arith.constant 0 : i32
    %c0_i32_0 = arith.constant 0 : i32
    %c0_i32_1 = arith.constant 0 : i32
    return %c0_i32, %c0_i32_0 : i32, i32
  }
  func.func @transform_5(%arg0: i32, %arg1: i32) -> (i32, i32) {
    %c0_i32 = arith.constant 0 : i32
    %c0_i32_0 = arith.constant 0 : i32
    %c0_i32_1 = arith.constant 0 : i32
    return %c0_i32, %c0_i32_0 : i32, i32
  }
  func.func @transform_6(%arg0: i32, %arg1: i32) -> (i32, i32) {
    %c0_i32 = arith.constant 0 : i32
    %c0_i32_0 = arith.constant 0 : i32
    %c0_i32_1 = arith.constant 0 : i32
    return %c0_i32, %c0_i32_0 : i32, i32
  }
  func.func @transform_7(%arg0: i32, %arg1: i32) -> (i32, i32, i32) {
    %c0_i32 = arith.constant 0 : i32
    %c0_i32_0 = arith.constant 0 : i32
    %c0_i32_1 = arith.constant 0 : i32
    return %arg0, %c0_i32, %c0_i32_0 : i32, i32, i32
  }
}

</mosaic_0001>

<llo_original>
// kernel: tpu_custom_call.1
$region0: #{tpu_custom_call.1}
  #allocation0 [shape = 'u32[]', space=smem, size = 0x4, offset = 0x4, fixed_abs, tag = 'smem constant byte address 0x4 - core index']
  #allocation1 [shape = 'u32[144,128]{1,0:T(1,128)}', space=vmem, size = 0x12000, scoped, tag = 'internal scratch']
  #allocation2 [shape = 'f32[1,51]{1,0:T(1,128)}', space=vmem, size = 0x200, scoped, tag = 'scratch operand']
  %s0 = inlined_call_operand.vmem [shape: f32[2,16,51], index: 0, kind: input, shape index: {}]
  %s1 = inlined_call_operand.vmem [shape: f32[51,544], index: 1, kind: input, shape index: {}]
  %s2 = inlined_call_operand.vmem [shape: f32[1,544], index: 2, kind: input, shape index: {}]
  %s3 = inlined_call_operand.vmem [shape: f32[544,64], index: 3, kind: input, shape index: {}]
  %s4 = inlined_call_operand.vmem [shape: f32[1,64], index: 4, kind: input, shape index: {}]
  %s5 = inlined_call_operand.vmem [shape: f32[64,128], index: 5, kind: input, shape index: {}]
  %s6 = inlined_call_operand.vmem [shape: f32[1,128], index: 6, kind: input, shape index: {}]
  %s7 = inlined_call_operand.hbm [shape: f32[2,1,128], index: 7, kind: output, shape index: {}]
  %s8 = sld [smem:[#allocation0]]
  $region69: #{tpu_custom_call.1} parent=0
    _
  %s10 = ssub.s32 1, %s8
  %s11 = scalar_select 0, %s10, %s8
  $region1: #{tpu_custom_call.1} parent=0
    #allocation3 [shape = 'u8[1024]{0}', space=vmem, size = 0x400, scoped, tag = 'output window, operand 0']
    #allocation4 [shape = 's32[2]{0}', space=sflag, size = 0x8, scoped, tag = 'scoped memory for tpu_custom_call.1']
    %12 = vsyncpa [#allocation4], 0
    %s13 = scalar_lea.sflag [#allocation4], 1
    %14 = vsyncpa %s13, 0
    loop: start=0, step=1, limit=6
    $region2: #{tpu_custom_call.1} parent=1 // loop_pre_header
      _
    $region3: #{tpu_custom_call.1} parent=1 // loop_header
      %s16 = sphi 0, %s20
      %p17 = scmp.ge.s32.totalorder %s16, 6
      %s23 = sphi 0, %s35
      %s24 = sphi 0, %s31
      %s25 = sphi 0, %s23
      %s26 = sphi 0, %s24
      %s27 = sphi 0, %s25
      %s28 = sphi 0, %s26
      %s40 = sphi 0, %s42
      %s43 = sphi 0, %s40
      %s44 = sphi 0, %s43
      %s60 = sphi 0, %s44
      %s64 = sphi 0, %s64
      %s66 = sphi 0, %s64
      %s67 = sphi 0, %s66
      %s81 = sphi 0, %s67
      %s85 = sphi 0, %s85
      %s87 = sphi 0, %s85
      %s88 = sphi 0, %s87
      %s102 = sphi 0, %s88
      %s106 = sphi 0, %s106
      %s108 = sphi 0, %s106
      %s109 = sphi 0, %s108
      %s123 = sphi 0, %s109
      %s127 = sphi 0, %s127
      %s129 = sphi 0, %s127
      %s130 = sphi 0, %s129
      %s144 = sphi 0, %s130
      %s148 = sphi 0, %s148
      %s150 = sphi 0, %s148
      %s151 = sphi 0, %s150
      %s165 = sphi 0, %s151
      %s169 = sphi 0, %s169
      %s171 = sphi 0, %s169
      %s172 = sphi 0, %s171
      %s186 = sphi 0, %s172
      %s192 = sphi 0, %s194
      %s195 = sphi 0, %s192
      %s196 = sphi 0, %s195
      %s212 = sphi 0, %s196
    $region4: #{tpu_custom_call.1} parent=1 // loop_header_branch
      %19 = sbr.rel (%p17) target = $region8
    $region5: #{tpu_custom_call.1} parent=1 // loop_body
      %s21 = ssub.s32 %s16, 1
      %s22 = ssub.s32 %s16, 2
      %s29 = sadd.s32 1, %s24
      %p30 = scmp.ge.s32.totalorder %s29, 2
      %s31 = scalar_select %p30, 0, %s29
      %s32 = sadd.s32 1, %s23
      %s33 = scalar_select %p30, %s32, %s23
      %p34 = scmp.ge.s32.totalorder %s33, 2
      %s35 = scalar_select %p34, 0, %s33
      %s36 = ssub.s32 %s23, %s35
      %s37 = ssub.s32 %s24, %s31
      %s38 = sor.u32 %s36, %s37
      %p39 = scmp.eq.s32.totalorder %s38, 0
      %s41 = sadd.s32 %s40, 1
      %s42 = scalar_select %p39, %s40, %s41
      %p45 = pneg %p39
      %p46 = scmp.eq.s32.totalorder %s16, 3
      %p47 = por %p45, %p46
      %p48 = scmp.ne.s32.totalorder %s40, %s43
      %p49 = scmp.eq.s32.totalorder %s16, 0
      %p50 = por %p48, %p49
      %p51 = scmp.ne.s32.totalorder %s40, %s43
      %p52 = scmp.eq.s32.totalorder %s21, 3
      %p53 = por %p51, %p52
      %p54 = scmp.ne.s32.totalorder %s43, %s44
      %p55 = scmp.eq.s32.totalorder %s21, 0
      %p56 = por %p54, %p55
      %p57 = scmp.ne.s32.totalorder %s43, %s44
      %p58 = scmp.eq.s32.totalorder %s22, 3
      %p59 = por %p57, %p58
      %p61 = scmp.ne.s32.totalorder %s44, %s60
      %p62 = scmp.eq.s32.totalorder %s22, 0
      %p63 = por %p61, %p62
      %s65 = sadd.s32 %s64, 1
      %p68 = scmp.eq.s32.totalorder %s16, 3
      %p69 = scmp.ne.s32.totalorder %s64, %s66
      %p70 = scmp.eq.s32.totalorder %s16, 0
      %p71 = por %p69, %p70
      %p72 = scmp.ne.s32.totalorder %s64, %s66
      %p73 = scmp.eq.s32.totalorder %s21, 3
      %p74 = por %p72, %p73
      %p75 = scmp.ne.s32.totalorder %s66, %s67
      %p76 = scmp.eq.s32.totalorder %s21, 0
      %p77 = por %p75, %p76
      %p78 = scmp.ne.s32.totalorder %s66, %s67
      %p79 = scmp.eq.s32.totalorder %s22, 3
      %p80 = por %p78, %p79
      %p82 = scmp.ne.s32.totalorder %s67, %s81
      %p83 = scmp.eq.s32.totalorder %s22, 0
      %p84 = por %p82, %p83
      %s86 = sadd.s32 %s85, 1
      %p89 = scmp.eq.s32.totalorder %s16, 3
      %p90 = scmp.ne.s32.totalorder %s85, %s87
      %p91 = scmp.eq.s32.totalorder %s16, 0
      %p92 = por %p90, %p91
      %p93 = scmp.ne.s32.totalorder %s85, %s87
      %p94 = scmp.eq.s32.totalorder %s21, 3
      %p95 = por %p93, %p94
      %p96 = scmp.ne.s32.totalorder %s87, %s88
      %p97 = scmp.eq.s32.totalorder %s21, 0
      %p98 = por %p96, %p97
      %p99 = scmp.ne.s32.totalorder %s87, %s88
      %p100 = scmp.eq.s32.totalorder %s22, 3
      %p101 = por %p99, %p100
      %p103 = scmp.ne.s32.totalorder %s88, %s102
      %p104 = scmp.eq.s32.totalorder %s22, 0
      %p105 = por %p103, %p104
      %s107 = sadd.s32 %s106, 1
      %p110 = scmp.eq.s32.totalorder %s16, 3
      %p111 = scmp.ne.s32.totalorder %s106, %s108
      %p112 = scmp.eq.s32.totalorder %s16, 0
      %p113 = por %p111, %p112
      %p114 = scmp.ne.s32.totalorder %s106, %s108
      %p115 = scmp.eq.s32.totalorder %s21, 3
      %p116 = por %p114, %p115
      %p117 = scmp.ne.s32.totalorder %s108, %s109
      %p118 = scmp.eq.s32.totalorder %s21, 0
      %p119 = por %p117, %p118
      %p120 = scmp.ne.s32.totalorder %s108, %s109
      %p121 = scmp.eq.s32.totalorder %s22, 3
      %p122 = por %p120, %p121
      %p124 = scmp.ne.s32.totalorder %s109, %s123
      %p125 = scmp.eq.s32.totalorder %s22, 0
      %p126 = por %p124, %p125
      %s128 = sadd.s32 %s127, 1
      %p131 = scmp.eq.s32.totalorder %s16, 3
      %p132 = scmp.ne.s32.totalorder %s127, %s129
      %p133 = scmp.eq.s32.totalorder %s16, 0
      %p134 = por %p132, %p133
      %p135 = scmp.ne.s32.totalorder %s127, %s129
      %p136 = scmp.eq.s32.totalorder %s21, 3
      %p137 = por %p135, %p136
      %p138 = scmp.ne.s32.totalorder %s129, %s130
      %p139 = scmp.eq.s32.totalorder %s21, 0
      %p140 = por %p138, %p139
      %p141 = scmp.ne.s32.totalorder %s129, %s130
      %p142 = scmp.eq.s32.totalorder %s22, 3
      %p143 = por %p141, %p142
      %p145 = scmp.ne.s32.totalorder %s130, %s144
      %p146 = scmp.eq.s32.totalorder %s22, 0
      %p147 = por %p145, %p146
      %s149 = sadd.s32 %s148, 1
      %p152 = scmp.eq.s32.totalorder %s16, 3
      %p153 = scmp.ne.s32.totalorder %s148, %s150
      %p154 = scmp.eq.s32.totalorder %s16, 0
      %p155 = por %p153, %p154
      %p156 = scmp.ne.s32.totalorder %s148, %s150
      %p157 = scmp.eq.s32.totalorder %s21, 3
      %p158 = por %p156, %p157
      %p159 = scmp.ne.s32.totalorder %s150, %s151
      %p160 = scmp.eq.s32.totalorder %s21, 0
      %p161 = por %p159, %p160
      %p162 = scmp.ne.s32.totalorder %s150, %s151
      %p163 = scmp.eq.s32.totalorder %s22, 3
      %p164 = por %p162, %p163
      %p166 = scmp.ne.s32.totalorder %s151, %s165
      %p167 = scmp.eq.s32.totalorder %s22, 0
      %p168 = por %p166, %p167
      %s170 = sadd.s32 %s169, 1
      %p173 = scmp.eq.s32.totalorder %s16, 3
      %p174 = scmp.ne.s32.totalorder %s169, %s171
      %p175 = scmp.eq.s32.totalorder %s16, 0
      %p176 = por %p174, %p175
      %p177 = scmp.ne.s32.totalorder %s169, %s171
      %p178 = scmp.eq.s32.totalorder %s21, 3
      %p179 = por %p177, %p178
      %p180 = scmp.ne.s32.totalorder %s171, %s172
      %p181 = scmp.eq.s32.totalorder %s21, 0
      %p182 = por %p180, %p181
      %p183 = scmp.ne.s32.totalorder %s171, %s172
      %p184 = scmp.eq.s32.totalorder %s22, 3
      %p185 = por %p183, %p184
      %p187 = scmp.ne.s32.totalorder %s172, %s186
      %p188 = scmp.eq.s32.totalorder %s22, 0
      %p189 = por %p187, %p188
      %s190 = ssub.s32 %s23, %s35
      %p191 = scmp.eq.s32.totalorder %s190, 0
      %s193 = sadd.s32 %s192, 1
      %s194 = scalar_select %p191, %s192, %s193
      %p197 = pneg %p191
      %p198 = scmp.eq.s32.totalorder %s16, 3
      %p199 = por %p197, %p198
      %p200 = scmp.ne.s32.totalorder %s192, %s195
      %p201 = scmp.eq.s32.totalorder %s16, 0
      %p202 = por %p200, %p201
      %p203 = scmp.ne.s32.totalorder %s192, %s195
      %p204 = scmp.eq.s32.totalorder %s21, 3
      %p205 = por %p203, %p204
      %p206 = scmp.ne.s32.totalorder %s195, %s196
      %p207 = scmp.eq.s32.totalorder %s21, 0
      %p208 = por %p206, %p207
      %p209 = scmp.ne.s32.totalorder %s195, %s196
      %p210 = scmp.eq.s32.totalorder %s22, 3
      %p211 = por %p209, %p210
      %p213 = scmp.ne.s32.totalorder %s196, %s212
      %p214 = scmp.eq.s32.totalorder %s22, 0
      %p215 = por %p213, %p214
      %p216 = scmp.le.s32.totalorder 1, %s16
      %p217 = scmp.lt.s32.totalorder %s16, 5
      %p218 = pnand %p216, %p217
      %p219 = pneg %p218
      // Predicated region
      $region9: #{tpu_custom_call.1} parent=5 // pred_check
        _
      $region10: #{tpu_custom_call.1} parent=5 // pred_check_branch
        %221 = sbr.rel (%p218) target = $region12
      $region11: #{tpu_custom_call.1} parent=5 // pred_region
        %s222 = ssub.s32 %s16, 1
        // Predicated region
        $region13: #{tpu_custom_call.1} parent=11 // pred_check
          %p223 = pneg %p77
        $region14: #{tpu_custom_call.1} parent=11 // pred_check_branch
          %225 = sbr.rel (%p223) target = $region16
        $region15: #{tpu_custom_call.1} parent=11 // pred_region
          _
        $region16: #{tpu_custom_call.1} parent=11 // pred_fallthru
          _
        // Predicated region
        $region17: #{tpu_custom_call.1} parent=11 // pred_check
          %p226 = pneg %p98
        $region18: #{tpu_custom_call.1} parent=11 // pred_check_branch
          %228 = sbr.rel (%p226) target = $region20
        $region19: #{tpu_custom_call.1} parent=11 // pred_region
          _
        $region20: #{tpu_custom_call.1} parent=11 // pred_fallthru
          _
        // Predicated region
        $region21: #{tpu_custom_call.1} parent=11 // pred_check
          %p229 = pneg %p119
        $region22: #{tpu_custom_call.1} parent=11 // pred_check_branch
          %231 = sbr.rel (%p229) target = $region24
        $region23: #{tpu_custom_call.1} parent=11 // pred_region
          _
        $region24: #{tpu_custom_call.1} parent=11 // pred_fallthru
          _
        // Predicated region
        $region25: #{tpu_custom_call.1} parent=11 // pred_check
          %p232 = pneg %p140
        $region26: #{tpu_custom_call.1} parent=11 // pred_check_branch
          %234 = sbr.rel (%p232) target = $region28
        $region27: #{tpu_custom_call.1} parent=11 // pred_region
          _
        $region28: #{tpu_custom_call.1} parent=11 // pred_fallthru
          _
        // Predicated region
        $region29: #{tpu_custom_call.1} parent=11 // pred_check
          %p235 = pneg %p161
        $region30: #{tpu_custom_call.1} parent=11 // pred_check_branch
          %237 = sbr.rel (%p235) target = $region32
        $region31: #{tpu_custom_call.1} parent=11 // pred_region
          _
        $region32: #{tpu_custom_call.1} parent=11 // pred_fallthru
          _
        // Predicated region
        $region33: #{tpu_custom_call.1} parent=11 // pred_check
          %p238 = pneg %p182
        $region34: #{tpu_custom_call.1} parent=11 // pred_check_branch
          %240 = sbr.rel (%p238) target = $region36
        $region35: #{tpu_custom_call.1} parent=11 // pred_region
          _
        $region36: #{tpu_custom_call.1} parent=11 // pred_fallthru
          _
      $region12: #{tpu_custom_call.1} parent=5 // pred_fallthru
        _
      %p241 = scmp.lt.s32.totalorder %s16, 4
      // Predicated region
      $region37: #{tpu_custom_call.1} parent=5 // pred_check
        %p242 = pneg %p241
      $region38: #{tpu_custom_call.1} parent=5 // pred_check_branch
        %244 = sbr.rel (%p242) target = $region40
      $region39: #{tpu_custom_call.1} parent=5 // pred_region
        // Predicated region
        $region41: #{tpu_custom_call.1} parent=39 // pred_check
          %p245 = pneg %p50
        $region42: #{tpu_custom_call.1} parent=39 // pred_check_branch
          %247 = sbr.rel (%p245) target = $region44
        $region43: #{tpu_custom_call.1} parent=39 // pred_region
          %p248 = scmp.lt.s32.totalorder %s23, 1
          %s249 = scalar_select %p248, %s23, 1
          %p250 = scmp.lt.s32.totalorder %s24, 1
          %s251 = scalar_select %p250, %s24, 1
          %s252 = smul.addr %s249, 2
          %s253 = sadd.s32 %s251, %s252
          %s254 = smul.addr %s253, 8
          %s255 = scalar_lea.vmem %s0, %s254
        $region44: #{tpu_custom_call.1} parent=39 // pred_fallthru
          _
      $region40: #{tpu_custom_call.1} parent=5 // pred_fallthru
        _
      %p256 = scmp.le.s32.totalorder 1, %s16
      %p257 = scmp.lt.s32.totalorder %s16, 5
      %p258 = pnand %p256, %p257
      %p259 = pneg %p258
      // Predicated region
      $region45: #{tpu_custom_call.1} parent=5 // pred_check
        _
      $region46: #{tpu_custom_call.1} parent=5 // pred_check_branch
        %261 = sbr.rel (%p258) target = $region48
      $region47: #{tpu_custom_call.1} parent=5 // pred_region
        %s262 = ssub.s32 %s16, 1
        %p263 = scmp.lt.s32.totalorder %s25, 1
        %s264 = scalar_select %p263, %s25, 1
        %p265 = scmp.lt.s32.totalorder %s26, 1
        %s266 = scalar_select %p265, %s26, 1
        %s267 = smul.addr %s264, 2
        %s268 = sadd.s32 %s266, %s267
        %s269 = smul.addr %s268, 8
        %s270 = scalar_lea.vmem %s0, %s269
        %p271 = pneg %p56
        %p272 = pneg %p53
        %p273 = pneg %p77
        %p274 = pneg %p74
        %p275 = pneg %p98
        %p276 = pneg %p95
        %p277 = pneg %p119
        %p278 = pneg %p116
        %p279 = pneg %p140
        %p280 = pneg %p137
        %p281 = pneg %p161
        %p282 = pneg %p158
        %p283 = pneg %p182
        %p284 = pneg %p179
        %p285 = pneg %p208
        %p286 = pneg %p205
        %s287 = sand.u32 %s195, 1
        %s288 = scalar_lea.sflag [#allocation4], %s287
        %s289 = sand.u32 %s195, 1
        %s290 = scalar_lea.vmem [#allocation3], %s289
        %p291 = scmp.lt.s32.totalorder %s25, 1
        %s292 = scalar_select %p291, %s25, 1
        %p293 = scmp.lt.s32.totalorder %s26, 1
        %s294 = scalar_select %p293, %s26, 1
        %s295 = smul.addr %s292, 2
        %s296 = sadd.s32 %s294, %s295
        %s297 = smul.addr %s296, 8
        %s298 = scalar_lea.vmem %s0, %s297
        %p299 = scmp.eq.s32.totalorder %s26, 0
        // Predicated region
        $region49: #{tpu_custom_call.1} parent=47 // pred_check
          %p300 = pneg %p299
        $region50: #{tpu_custom_call.1} parent=47 // pred_check_branch
          %302 = sbr.rel (%p300) target = $region52
        $region51: #{tpu_custom_call.1} parent=47 // pred_region
          %vm303 = vcmask 409600
          %304 = vst.msk [vmem:[#allocation2] sm:$0x1] %vm303, 0.0
        $region52: #{tpu_custom_call.1} parent=47 // pred_fallthru
          _
        %v305 = vld [vmem:[#allocation2] sm:$0x1]
        %v306 = vld [vmem:[%s298] sm:$0xff]
        %vm307 = vcmask 416768
        %v308 = vsel %vm307, %v306, 0.0
        %v309 = vrot.slane %v308, 4
        %v310 = vadd.f32 %v308, %v309
        %v311 = vrot.slane %v310, 2
        %v312 = vadd.f32 %v310, %v311
        %v313 = vrot.slane %v312, 1
        %v314 = vadd.f32 %v312, %v313
        %v315 = vadd.f32 %v305, %v314
        %vm316 = vcmask 409600
        %317 = vst.msk [vmem:[#allocation2] sm:$0x1] %vm316, %v315
        %p318 = scmp.eq.s32.totalorder %s26, 1
        // Predicated region
        $region53: #{tpu_custom_call.1} parent=47 // pred_check
          %p319 = pneg %p318
        $region54: #{tpu_custom_call.1} parent=47 // pred_check_branch
          %321 = sbr.rel (%p319) target = $region56
        $region55: #{tpu_custom_call.1} parent=47 // pred_region
          %v322 = vld [vmem:[#allocation2] sm:$0x1]
          %v323 = vmul.f32 %v322, 0.0625
          %v324 = vld [vmem:[%s1] sm:$0xff]
          %v325 = vld [vmem:[%s1 + $0x8] sm:$0xff]
          %v326 = vld [vmem:[%s1 + $0x10] sm:$0xff]
          %v327 = vld [vmem:[%s1 + $0x18] sm:$0xff]
          %v328 = vld [vmem:[%s1 + $0x20] sm:$0xff]
          %v329 = vld [vmem:[%s1 + $0x28] sm:$0xff]
          %v330 = vld [vmem:[%s1 + $0x30] sm:$0xff]
          %v331 = vld [vmem:[%s1 + $0x38] sm:$0xff]
          %v332 = vld [vmem:[%s1 + $0x40] sm:$0xff]
          %v333 = vld [vmem:[%s1 + $0x48] sm:$0xff]
          %v334 = vld [vmem:[%s1 + $0x50] sm:$0xff]
          %v335 = vld [vmem:[%s1 + $0x58] sm:$0xff]
          %v336 = vld [vmem:[%s1 + $0x60] sm:$0xff]
          %v337 = vld [vmem:[%s1 + $0x68] sm:$0xff]
          %v338 = vld [vmem:[%s1 + $0x70] sm:$0xff]
          %v339 = vld [vmem:[%s1 + $0x78] sm:$0xff]
          %v340 = vld [vmem:[%s1 + $0x80] sm:$0xff]
          %v341 = vld [vmem:[%s1 + $0x88] sm:$0xff]
          %v342 = vld [vmem:[%s1 + $0x90] sm:$0xff]
          %v343 = vld [vmem:[%s1 + $0x98] sm:$0xff]
          %v344 = vld [vmem:[%s1 + $0xa0] sm:$0xff]
          %v345 = vld [vmem:[%s1 + $0xa8] sm:$0xff]
          %v346 = vld [vmem:[%s1 + $0xb0] sm:$0xff]
          %v347 = vld [vmem:[%s1 + $0xb8] sm:$0xff]
          %v348 = vld [vmem:[%s1 + $0xc0] sm:$0xff]
          %v349 = vld [vmem:[%s1 + $0xc8] sm:$0xff]
          %v350 = vld [vmem:[%s1 + $0xd0] sm:$0xff]
          %v351 = vld [vmem:[%s1 + $0xd8] sm:$0xff]
          %v352 = vld [vmem:[%s1 + $0xe0] sm:$0xff]
          %v353 = vld [vmem:[%s1 + $0xe8] sm:$0xff]
          %v354 = vld [vmem:[%s1 + $0xf0] sm:$0x7]
          %v355 = vld [vmem:[%s1 + $0xf8] sm:$0x7]
          %v356 = vld [vmem:[%s1 + $0x100] sm:$0x7]
          %v357 = vld [vmem:[%s1 + $0x108] sm:$0x7]
          %v358 = vld [vmem:[%s1 + $0x110] sm:$0x7]
          %v359 = vld [vmem:[%s2] sm:$0x1f]
          %v361 = vlaneseq
          %v362 = vshrl.u32 %v361, 7
          %v363 = vsub.s32 0, %v362
          %v364 = vrot.slane %v359, %v363
          %v365 = vlaneseq
          %v366 = vshrl.u32 %v365, 7
          %v367 = vsub.s32 1, %v366
          %v368 = vrot.slane %v359, %v367
          %v369 = vlaneseq
          %v370 = vshrl.u32 %v369, 7
          %v371 = vsub.s32 2, %v370
          %v372 = vrot.slane %v359, %v371
          %v373 = vlaneseq
          %v374 = vshrl.u32 %v373, 7
          %v375 = vsub.s32 3, %v374
          %v376 = vrot.slane %v359, %v375
          %v377 = vlaneseq
          %v378 = vshrl.u32 %v377, 7
          %v379 = vsub.s32 4, %v378
          %v380 = vrot.slane %v359, %v379
          %v387 = vsel %vm307, %v323, 0
          %vm389 = vcmask 1042432
          %v391 = vsel %vm389, %v354, 0
          %v394 = vsel %vm389, %v355, 0
          %v397 = vsel %vm389, %v356, 0
          %v400 = vsel %vm389, %v357, 0
          %v403 = vsel %vm389, %v358, 0
          %405 = vmatprep.subr.mxu0 %v325
          %406 = vmatpush1.msra.mxu0 %v324
          %407 = vmatprep.subr.mxu0 %v330
          %408 = vmatpush1.msra.mxu0 %v329
          %409 = vmatprep.subr.mxu0 %v335
          %410 = vmatpush1.msra.mxu0 %v334
          %411 = vmatprep.subr.mxu0 %v340
          %412 = vmatpush1.msra.mxu0 %v339
          %413 = vmatprep.subr.mxu0 %v345
          %414 = vmatpush1.msra.mxu0 %v344
          %415 = vmatprep.subr.mxu0 %v350
          %416 = vmatpush1.msra.mxu0 %v349
          %417 = vmatprep.subr.mxu0 %v394
          %418 = vmatpush1.msra.mxu0 %v391
          %419 = vmatprep.subr.mxu0 0.0
          %420 = vmatpush1.msra.mxu0 0.0
          %421 = vmatprep.subr.mxu0 0.0
          %422 = vmatpush1.msra.mxu0 0.0
          %423 = vmatprep.subr.mxu0 0.0
          %424 = vmatpush1.msra.mxu0 0.0
          %425 = vmatprep.subr.mxu0 0.0
          %426 = vmatpush1.msra.mxu0 0.0
          %427 = vmatprep.subr.mxu0 0.0
          %428 = vmatpush1.msra.mxu0 0.0
          %429 = vmatprep.subr.mxu0 0.0
          %430 = vmatpush1.msra.mxu0 0.0
          %431 = vmatprep.subr.mxu0 0.0
          %432 = vmatpush1.msra.mxu0 0.0
          %433 = vmatprep.subr.mxu0 0.0
          %434 = vmatpush1.msra.mxu0 0.0
          %435 = vmatprep.subr.mxu0 0.0
          %436 = vmatpush1.msra.mxu0 0.0
          %437 = vmatprep.subr.mxu0 0.0
          %438 = vmatpush1.msra.mxu0 0.0
          %439 = vmatprep.subr.mxu0 0.0
          %440 = vmatpush1.msra.mxu0 0.0
          %441 = vmatprep.subr.mxu0 0.0
          %442 = vmatpush1.msra.mxu0 0.0
          %443 = vmatprep.subr.mxu0 0.0
          %444 = vmatpush1.msra.mxu0 0.0
          %445 = vmatprep.subr.mxu0 0.0
          %446 = vmatpush1.msra.mxu0 0.0
          %447 = vmatprep.subr.mxu0 0.0
          %448 = vmatpush1.msra.mxu0 0.0
          %449 = vmatprep.subr.mxu0 0.0
          %450 = vmatpush1.msra.mxu0 0.0
          %451 = vmatprep.subr.mxu0 0.0
          %452 = vmatpush1.msra.mxu0 0.0
          %453 = vmatprep.subr.mxu0 0.0
          %454 = vmatpush1.msra.mxu0 0.0
          %455 = vmatprep.subr.mxu0 0.0
          %456 = vmatpush1.msra.mxu0 0.0
          %457 = vmatprep.subr.mxu0 0.0
          %458 = vmatpush1.msra.mxu0 0.0
          %459 = vmatprep.subr.mxu0 0.0
          %460 = vmatpush1.msra.mxu0 0.0
          %461 = vmatprep.subr.mxu0 0.0
          %462 = vmatpush1.msra.mxu0 0.0
          %463 = vmatprep.subr.mxu0 0.0
          %464 = vmatpush1.msra.mxu0 0.0
          %465 = vmatprep.subr.mxu0 0.0
          %466 = vmatpush1.msra.mxu0 0.0
          %467 = vmatprep.subr.mxu0 0.0
          %468 = vmatpush1.msra.mxu0 0.0
          %469 = vmatprep.mubr.f32.mxu0 0.0
          %470 = vmatmul.mubr.f32.gmra.mrb[0].mxu0 %v387
          %v471 = vpop.f32.mrb[0].mxu0
          %v472 = vadd.f32 %v364, %v471
          %v473 = vpop.f32.mrb[0].mxu0
          %v474 = vadd.f32 %v368, %v473
          %475 = vdwg.mxu0
          %476 = vmatprep.subr.mxu0 %v327
          %477 = vmatpush1.msra.mxu0 %v326
          %478 = vmatprep.subr.mxu0 %v332
          %479 = vmatpush1.msra.mxu0 %v331
          %480 = vmatprep.subr.mxu0 %v337
          %481 = vmatpush1.msra.mxu0 %v336
          %482 = vmatprep.subr.mxu0 %v342
          %483 = vmatpush1.msra.mxu0 %v341
          %484 = vmatprep.subr.mxu0 %v347
          %485 = vmatpush1.msra.mxu0 %v346
          %486 = vmatprep.subr.mxu0 %v352
          %487 = vmatpush1.msra.mxu0 %v351
          %488 = vmatprep.subr.mxu0 %v400
          %489 = vmatpush1.msra.mxu0 %v397
          %490 = vmatprep.subr.mxu0 0.0
          %491 = vmatpush1.msra.mxu0 0.0
          %492 = vmatprep.subr.mxu0 0.0
          %493 = vmatpush1.msra.mxu0 0.0
          %494 = vmatprep.subr.mxu0 0.0
          %495 = vmatpush1.msra.mxu0 0.0
          %496 = vmatprep.subr.mxu0 0.0
          %497 = vmatpush1.msra.mxu0 0.0
          %498 = vmatprep.subr.mxu0 0.0
          %499 = vmatpush1.msra.mxu0 0.0
          %500 = vmatprep.subr.mxu0 0.0
          %501 = vmatpush1.msra.mxu0 0.0
          %502 = vmatprep.subr.mxu0 0.0
          %503 = vmatpush1.msra.mxu0 0.0
          %504 = vmatprep.subr.mxu0 0.0
          %505 = vmatpush1.msra.mxu0 0.0
          %506 = vmatprep.subr.mxu0 0.0
          %507 = vmatpush1.msra.mxu0 0.0
          %508 = vmatprep.subr.mxu0 0.0
          %509 = vmatpush1.msra.mxu0 0.0
          %510 = vmatprep.subr.mxu0 0.0
          %511 = vmatpush1.msra.mxu0 0.0
          %512 = vmatprep.subr.mxu0 0.0
          %513 = vmatpush1.msra.mxu0 0.0
          %514 = vmatprep.subr.mxu0 0.0
          %515 = vmatpush1.msra.mxu0 0.0
          %516 = vmatprep.subr.mxu0 0.0
          %517 = vmatpush1.msra.mxu0 0.0
          %518 = vmatprep.subr.mxu0 0.0
          %519 = vmatpush1.msra.mxu0 0.0
          %520 = vmatprep.subr.mxu0 0.0
          %521 = vmatpush1.msra.mxu0 0.0
          %522 = vmatprep.subr.mxu0 0.0
          %523 = vmatpush1.msra.mxu0 0.0
          %524 = vmatprep.subr.mxu0 0.0
          %525 = vmatpush1.msra.mxu0 0.0
          %526 = vmatprep.subr.mxu0 0.0
          %527 = vmatpush1.msra.mxu0 0.0
          %528 = vmatprep.subr.mxu0 0.0
          %529 = vmatpush1.msra.mxu0 0.0
          %530 = vmatprep.subr.mxu0 0.0
          %531 = vmatpush1.msra.mxu0 0.0
          %532 = vmatprep.subr.mxu0 0.0
          %533 = vmatpush1.msra.mxu0 0.0
          %534 = vmatprep.subr.mxu0 0.0
          %535 = vmatpush1.msra.mxu0 0.0
          %536 = vmatprep.subr.mxu0 0.0
          %537 = vmatpush1.msra.mxu0 0.0
          %538 = vmatprep.subr.mxu0 0.0
          %539 = vmatpush1.msra.mxu0 0.0
          %540 = vmatprep.mubr.f32.mxu0 0.0
          %541 = vmatmul.mubr.f32.gmra.mrb[0].mxu0 %v387
          %v542 = vpop.f32.mrb[0].mxu0
          %v543 = vadd.f32 %v372, %v542
          %v544 = vpop.f32.mrb[0].mxu0
          %v545 = vadd.f32 %v376, %v544
          %546 = vdwg.mxu0
          %547 = vmatprep.subr.mxu0 0.0
          %548 = vmatpush1.msra.mxu0 %v328
          %549 = vmatprep.subr.mxu0 0.0
          %550 = vmatpush1.msra.mxu0 %v333
          %551 = vmatprep.subr.mxu0 0.0
          %552 = vmatpush1.msra.mxu0 %v338
          %553 = vmatprep.subr.mxu0 0.0
          %554 = vmatpush1.msra.mxu0 %v343
          %555 = vmatprep.subr.mxu0 0.0
          %556 = vmatpush1.msra.mxu0 %v348
          %557 = vmatprep.subr.mxu0 0.0
          %558 = vmatpush1.msra.mxu0 %v353
          %559 = vmatprep.subr.mxu0 0.0
          %560 = vmatpush1.msra.mxu0 %v403
          %561 = vmatprep.subr.mxu0 0.0
          %562 = vmatpush1.msra.mxu0 0.0
          %563 = vmatprep.subr.mxu0 0.0
          %564 = vmatpush1.msra.mxu0 0.0
          %565 = vmatprep.subr.mxu0 0.0
          %566 = vmatpush1.msra.mxu0 0.0
          %567 = vmatprep.subr.mxu0 0.0
          %568 = vmatpush1.msra.mxu0 0.0
          %569 = vmatprep.subr.mxu0 0.0
          %570 = vmatpush1.msra.mxu0 0.0
          %571 = vmatprep.subr.mxu0 0.0
          %572 = vmatpush1.msra.mxu0 0.0
          %573 = vmatprep.subr.mxu0 0.0
          %574 = vmatpush1.msra.mxu0 0.0
          %575 = vmatprep.subr.mxu0 0.0
          %576 = vmatpush1.msra.mxu0 0.0
          %577 = vmatprep.subr.mxu0 0.0
          %578 = vmatpush1.msra.mxu0 0.0
          %579 = vmatprep.subr.mxu0 0.0
          %580 = vmatpush1.msra.mxu0 0.0
          %581 = vmatprep.subr.mxu0 0.0
          %582 = vmatpush1.msra.mxu0 0.0
          %583 = vmatprep.subr.mxu0 0.0
          %584 = vmatpush1.msra.mxu0 0.0
          %585 = vmatprep.subr.mxu0 0.0
          %586 = vmatpush1.msra.mxu0 0.0
          %587 = vmatprep.subr.mxu0 0.0
          %588 = vmatpush1.msra.mxu0 0.0
          %589 = vmatprep.subr.mxu0 0.0
          %590 = vmatpush1.msra.mxu0 0.0
          %591 = vmatprep.subr.mxu0 0.0
          %592 = vmatpush1.msra.mxu0 0.0
          %593 = vmatprep.subr.mxu0 0.0
          %594 = vmatpush1.msra.mxu0 0.0
          %595 = vmatprep.subr.mxu0 0.0
          %596 = vmatpush1.msra.mxu0 0.0
          %597 = vmatprep.subr.mxu0 0.0
          %598 = vmatpush1.msra.mxu0 0.0
          %599 = vmatprep.subr.mxu0 0.0
          %600 = vmatpush1.msra.mxu0 0.0
          %601 = vmatprep.subr.mxu0 0.0
          %602 = vmatpush1.msra.mxu0 0.0
          %603 = vmatprep.subr.mxu0 0.0
          %604 = vmatpush1.msra.mxu0 0.0
          %605 = vmatprep.subr.mxu0 0.0
          %606 = vmatpush1.msra.mxu0 0.0
          %607 = vmatprep.subr.mxu0 0.0
          %608 = vmatpush1.msra.mxu0 0.0
          %609 = vmatprep.subr.mxu0 0.0
          %610 = vmatpush1.msra.mxu0 0.0
          %611 = vmatprep.mubr.f32.mxu0 0.0
          %612 = vmatmul.mubr.f32.gmra.mrb[0].mxu0 %v387
          %v613 = vpop.f32.mrb[0].mxu0
          %v614 = vadd.f32 %v380, %v613
          %v615 = vpop.f32.mrb[0].mxu0
          %616 = vdwg.mxu0
          %v617 = vld [vmem:[%s3] sm:$0xff]
          %v618 = vld [vmem:[%s3 + $0x8] sm:$0xff]
          %v619 = vld [vmem:[%s3 + $0x10] sm:$0xff]
          %v620 = vld [vmem:[%s3 + $0x18] sm:$0xff]
          %v621 = vld [vmem:[%s3 + $0x20] sm:$0xff]
          %v622 = vld [vmem:[%s3 + $0x28] sm:$0xff]
          %v623 = vld [vmem:[%s3 + $0x30] sm:$0xff]
          %v624 = vld [vmem:[%s3 + $0x38] sm:$0xff]
          %v625 = vld [vmem:[%s3 + $0x40] sm:$0xff]
          %v626 = vld [vmem:[%s3 + $0x48] sm:$0xff]
          %v627 = vld [vmem:[%s3 + $0x50] sm:$0xff]
          %v628 = vld [vmem:[%s3 + $0x58] sm:$0xff]
          %v629 = vld [vmem:[%s3 + $0x60] sm:$0xff]
          %v630 = vld [vmem:[%s3 + $0x68] sm:$0xff]
          %v631 = vld [vmem:[%s3 + $0x70] sm:$0xff]
          %v632 = vld [vmem:[%s3 + $0x78] sm:$0xff]
          %v633 = vld [vmem:[%s3 + $0x80] sm:$0xff]
          %v634 = vld [vmem:[%s3 + $0x88] sm:$0xff]
          %v635 = vld [vmem:[%s3 + $0x90] sm:$0xff]
          %v636 = vld [vmem:[%s3 + $0x98] sm:$0xff]
          %v637 = vld [vmem:[%s3 + $0xa0] sm:$0xff]
          %v638 = vld [vmem:[%s3 + $0xa8] sm:$0xff]
          %v639 = vld [vmem:[%s3 + $0xb0] sm:$0xff]
          %v640 = vld [vmem:[%s3 + $0xb8] sm:$0xff]
          %v641 = vld [vmem:[%s3 + $0xc0] sm:$0xff]
          %v642 = vld [vmem:[%s3 + $0xc8] sm:$0xff]
          %v643 = vld [vmem:[%s3 + $0xd0] sm:$0xff]
          %v644 = vld [vmem:[%s3 + $0xd8] sm:$0xff]
          %v645 = vld [vmem:[%s3 + $0xe0] sm:$0xff]
          %v646 = vld [vmem:[%s3 + $0xe8] sm:$0xff]
          %v647 = vld [vmem:[%s3 + $0xf0] sm:$0xff]
          %v648 = vld [vmem:[%s3 + $0xf8] sm:$0xff]
          %v649 = vld [vmem:[%s3 + $0x100] sm:$0xff]
          %v650 = vld [vmem:[%s3 + $0x108] sm:$0xff]
          %v651 = vld [vmem:[%s3 + $0x110] sm:$0xff]
          %v652 = vld [vmem:[%s3 + $0x118] sm:$0xff]
          %v653 = vld [vmem:[%s3 + $0x120] sm:$0xff]
          %v654 = vld [vmem:[%s3 + $0x128] sm:$0xff]
          %v655 = vld [vmem:[%s3 + $0x130] sm:$0xff]
          %v656 = vld [vmem:[%s3 + $0x138] sm:$0xff]
          %v657 = vld [vmem:[%s3 + $0x140] sm:$0xff]
          %v658 = vld [vmem:[%s3 + $0x148] sm:$0xff]
          %v659 = vld [vmem:[%s3 + $0x150] sm:$0xff]
          %v660 = vld [vmem:[%s3 + $0x158] sm:$0xff]
          %v661 = vld [vmem:[%s3 + $0x160] sm:$0xff]
          %v662 = vld [vmem:[%s3 + $0x168] sm:$0xff]
          %v663 = vld [vmem:[%s3 + $0x170] sm:$0xff]
          %v664 = vld [vmem:[%s3 + $0x178] sm:$0xff]
          %v665 = vld [vmem:[%s3 + $0x180] sm:$0xff]
          %v666 = vld [vmem:[%s3 + $0x188] sm:$0xff]
          %v667 = vld [vmem:[%s3 + $0x190] sm:$0xff]
          %v668 = vld [vmem:[%s3 + $0x198] sm:$0xff]
          %v669 = vld [vmem:[%s3 + $0x1a0] sm:$0xff]
          %v670 = vld [vmem:[%s3 + $0x1a8] sm:$0xff]
          %v671 = vld [vmem:[%s3 + $0x1b0] sm:$0xff]
          %v672 = vld [vmem:[%s3 + $0x1b8] sm:$0xff]
          %v673 = vld [vmem:[%s3 + $0x1c0] sm:$0xff]
          %v674 = vld [vmem:[%s3 + $0x1c8] sm:$0xff]
          %v675 = vld [vmem:[%s3 + $0x1d0] sm:$0xff]
          %v676 = vld [vmem:[%s3 + $0x1d8] sm:$0xff]
          %v677 = vld [vmem:[%s3 + $0x1e0] sm:$0xff]
          %v678 = vld [vmem:[%s3 + $0x1e8] sm:$0xff]
          %v679 = vld [vmem:[%s3 + $0x1f0] sm:$0xff]
          %v680 = vld [vmem:[%s3 + $0x1f8] sm:$0xff]
          %v681 = vld [vmem:[%s3 + $0x200] sm:$0xff]
          %v682 = vld [vmem:[%s3 + $0x208] sm:$0xff]
          %v683 = vld [vmem:[%s3 + $0x210] sm:$0xff]
          %v684 = vld [vmem:[%s3 + $0x218] sm:$0xff]
          %v685 = vld [vmem:[%s4] sm:$0x1]
          %vm686 = vcmask 261120
          %v688 = vsel %vm686, %v614, 0
          %690 = vmatprep.subr.mxu0 0.0
          %691 = vmatpush1.msra.mxu0 %v617
          %692 = vmatprep.subr.mxu0 0.0
          %693 = vmatpush1.msra.mxu0 %v618
          %694 = vmatprep.subr.mxu0 0.0
          %695 = vmatpush1.msra.mxu0 %v619
          %696 = vmatprep.subr.mxu0 0.0
          %697 = vmatpush1.msra.mxu0 %v620
          %698 = vmatprep.subr.mxu0 0.0
          %699 = vmatpush1.msra.mxu0 %v621
          %700 = vmatprep.subr.mxu0 0.0
          %701 = vmatpush1.msra.mxu0 %v622
          %702 = vmatprep.subr.mxu0 0.0
          %703 = vmatpush1.msra.mxu0 %v623
          %704 = vmatprep.subr.mxu0 0.0
          %705 = vmatpush1.msra.mxu0 %v624
          %706 = vmatprep.subr.mxu0 0.0
          %707 = vmatpush1.msra.mxu0 %v625
          %708 = vmatprep.subr.mxu0 0.0
          %709 = vmatpush1.msra.mxu0 %v626
          %710 = vmatprep.subr.mxu0 0.0
          %711 = vmatpush1.msra.mxu0 %v627
          %712 = vmatprep.subr.mxu0 0.0
          %713 = vmatpush1.msra.mxu0 %v628
          %714 = vmatprep.subr.mxu0 0.0
          %715 = vmatpush1.msra.mxu0 %v629
          %716 = vmatprep.subr.mxu0 0.0
          %717 = vmatpush1.msra.mxu0 %v630
          %718 = vmatprep.subr.mxu0 0.0
          %719 = vmatpush1.msra.mxu0 %v631
          %720 = vmatprep.subr.mxu0 0.0
          %721 = vmatpush1.msra.mxu0 %v632
          %722 = vmatprep.subr.mxu0 0.0
          %723 = vmatpush1.msra.mxu0 %v633
          %724 = vmatprep.subr.mxu0 0.0
          %725 = vmatpush1.msra.mxu0 %v634
          %726 = vmatprep.subr.mxu0 0.0
          %727 = vmatpush1.msra.mxu0 %v635
          %728 = vmatprep.subr.mxu0 0.0
          %729 = vmatpush1.msra.mxu0 %v636
          %730 = vmatprep.subr.mxu0 0.0
          %731 = vmatpush1.msra.mxu0 %v637
          %732 = vmatprep.subr.mxu0 0.0
          %733 = vmatpush1.msra.mxu0 %v638
          %734 = vmatprep.subr.mxu0 0.0
          %735 = vmatpush1.msra.mxu0 %v639
          %736 = vmatprep.subr.mxu0 0.0
          %737 = vmatpush1.msra.mxu0 %v640
          %738 = vmatprep.subr.mxu0 0.0
          %739 = vmatpush1.msra.mxu0 %v641
          %740 = vmatprep.subr.mxu0 0.0
          %741 = vmatpush1.msra.mxu0 %v642
          %742 = vmatprep.subr.mxu0 0.0
          %743 = vmatpush1.msra.mxu0 %v643
          %744 = vmatprep.subr.mxu0 0.0
          %745 = vmatpush1.msra.mxu0 %v644
          %746 = vmatprep.subr.mxu0 0.0
          %747 = vmatpush1.msra.mxu0 %v645
          %748 = vmatprep.subr.mxu0 0.0
          %749 = vmatpush1.msra.mxu0 %v646
          %750 = vmatprep.subr.mxu0 0.0
          %751 = vmatpush1.msra.mxu0 %v647
          %752 = vmatprep.subr.mxu0 0.0
          %753 = vmatpush1.msra.mxu0 %v648
          %754 = vmatprep.mubr.f32.mxu0 %v474
          %755 = vmatmul.mubr.f32.gmra.mrb[0].mxu0 %v472
          %v756 = vpop.f32.mrb[0].mxu0
          %v757 = vadd.f32 %v685, %v756
          %v758 = vpop.f32.mrb[0].mxu0
          %759 = vdwg.mxu0
          %760 = vmatprep.subr.mxu0 0.0
          %761 = vmatpush1.msra.mxu0 %v649
          %762 = vmatprep.subr.mxu0 0.0
          %763 = vmatpush1.msra.mxu0 %v650
          %764 = vmatprep.subr.mxu0 0.0
          %765 = vmatpush1.msra.mxu0 %v651
          %766 = vmatprep.subr.mxu0 0.0
          %767 = vmatpush1.msra.mxu0 %v652
          %768 = vmatprep.subr.mxu0 0.0
          %769 = vmatpush1.msra.mxu0 %v653
          %770 = vmatprep.subr.mxu0 0.0
          %771 = vmatpush1.msra.mxu0 %v654
          %772 = vmatprep.subr.mxu0 0.0
          %773 = vmatpush1.msra.mxu0 %v655
          %774 = vmatprep.subr.mxu0 0.0
          %775 = vmatpush1.msra.mxu0 %v656
          %776 = vmatprep.subr.mxu0 0.0
          %777 = vmatpush1.msra.mxu0 %v657
          %778 = vmatprep.subr.mxu0 0.0
          %779 = vmatpush1.msra.mxu0 %v658
          %780 = vmatprep.subr.mxu0 0.0
          %781 = vmatpush1.msra.mxu0 %v659
          %782 = vmatprep.subr.mxu0 0.0
          %783 = vmatpush1.msra.mxu0 %v660
          %784 = vmatprep.subr.mxu0 0.0
          %785 = vmatpush1.msra.mxu0 %v661
          %786 = vmatprep.subr.mxu0 0.0
          %787 = vmatpush1.msra.mxu0 %v662
          %788 = vmatprep.subr.mxu0 0.0
          %789 = vmatpush1.msra.mxu0 %v663
          %790 = vmatprep.subr.mxu0 0.0
          %791 = vmatpush1.msra.mxu0 %v664
          %792 = vmatprep.subr.mxu0 0.0
          %793 = vmatpush1.msra.mxu0 %v665
          %794 = vmatprep.subr.mxu0 0.0
          %795 = vmatpush1.msra.mxu0 %v666
          %796 = vmatprep.subr.mxu0 0.0
          %797 = vmatpush1.msra.mxu0 %v667
          %798 = vmatprep.subr.mxu0 0.0
          %799 = vmatpush1.msra.mxu0 %v668
          %800 = vmatprep.subr.mxu0 0.0
          %801 = vmatpush1.msra.mxu0 %v669
          %802 = vmatprep.subr.mxu0 0.0
          %803 = vmatpush1.msra.mxu0 %v670
          %804 = vmatprep.subr.mxu0 0.0
          %805 = vmatpush1.msra.mxu0 %v671
          %806 = vmatprep.subr.mxu0 0.0
          %807 = vmatpush1.msra.mxu0 %v672
          %808 = vmatprep.subr.mxu0 0.0
          %809 = vmatpush1.msra.mxu0 %v673
          %810 = vmatprep.subr.mxu0 0.0
          %811 = vmatpush1.msra.mxu0 %v674
          %812 = vmatprep.subr.mxu0 0.0
          %813 = vmatpush1.msra.mxu0 %v675
          %814 = vmatprep.subr.mxu0 0.0
          %815 = vmatpush1.msra.mxu0 %v676
          %816 = vmatprep.subr.mxu0 0.0
          %817 = vmatpush1.msra.mxu0 %v677
          %818 = vmatprep.subr.mxu0 0.0
          %819 = vmatpush1.msra.mxu0 %v678
          %820 = vmatprep.subr.mxu0 0.0
          %821 = vmatpush1.msra.mxu0 %v679
          %822 = vmatprep.subr.mxu0 0.0
          %823 = vmatpush1.msra.mxu0 %v680
          %824 = vmatprep.mubr.f32.mxu0 %v545
          %825 = vmatmul.mubr.f32.gmra.mrb[0].mxu0 %v543
          %v826 = vpop.f32.mrb[0].mxu0
          %v827 = vadd.f32 %v757, %v826
          %v828 = vpop.f32.mrb[0].mxu0
          %829 = vdwg.mxu0
          %830 = vmatprep.subr.mxu0 0.0
          %831 = vmatpush1.msra.mxu0 %v681
          %832 = vmatprep.subr.mxu0 0.0
          %833 = vmatpush1.msra.mxu0 %v682
          %834 = vmatprep.subr.mxu0 0.0
          %835 = vmatpush1.msra.mxu0 %v683
          %836 = vmatprep.subr.mxu0 0.0
          %837 = vmatpush1.msra.mxu0 %v684
          %838 = vmatprep.subr.mxu0 0.0
          %839 = vmatpush1.msra.mxu0 0.0
          %840 = vmatprep.subr.mxu0 0.0
          %841 = vmatpush1.msra.mxu0 0.0
          %842 = vmatprep.subr.mxu0 0.0
          %843 = vmatpush1.msra.mxu0 0.0
          %844 = vmatprep.subr.mxu0 0.0
          %845 = vmatpush1.msra.mxu0 0.0
          %846 = vmatprep.subr.mxu0 0.0
          %847 = vmatpush1.msra.mxu0 0.0
          %848 = vmatprep.subr.mxu0 0.0
          %849 = vmatpush1.msra.mxu0 0.0
          %850 = vmatprep.subr.mxu0 0.0
          %851 = vmatpush1.msra.mxu0 0.0
          %852 = vmatprep.subr.mxu0 0.0
          %853 = vmatpush1.msra.mxu0 0.0
          %854 = vmatprep.subr.mxu0 0.0
          %855 = vmatpush1.msra.mxu0 0.0
          %856 = vmatprep.subr.mxu0 0.0
          %857 = vmatpush1.msra.mxu0 0.0
          %858 = vmatprep.subr.mxu0 0.0
          %859 = vmatpush1.msra.mxu0 0.0
          %860 = vmatprep.subr.mxu0 0.0
          %861 = vmatpush1.msra.mxu0 0.0
          %862 = vmatprep.subr.mxu0 0.0
          %863 = vmatpush1.msra.mxu0 0.0
          %864 = vmatprep.subr.mxu0 0.0
          %865 = vmatpush1.msra.mxu0 0.0
          %866 = vmatprep.subr.mxu0 0.0
          %867 = vmatpush1.msra.mxu0 0.0
          %868 = vmatprep.subr.mxu0 0.0
          %869 = vmatpush1.msra.mxu0 0.0
          %870 = vmatprep.subr.mxu0 0.0
          %871 = vmatpush1.msra.mxu0 0.0
          %872 = vmatprep.subr.mxu0 0.0
          %873 = vmatpush1.msra.mxu0 0.0
          %874 = vmatprep.subr.mxu0 0.0
          %875 = vmatpush1.msra.mxu0 0.0
          %876 = vmatprep.subr.mxu0 0.0
          %877 = vmatpush1.msra.mxu0 0.0
          %878 = vmatprep.subr.mxu0 0.0
          %879 = vmatpush1.msra.mxu0 0.0
          %880 = vmatprep.subr.mxu0 0.0
          %881 = vmatpush1.msra.mxu0 0.0
          %882 = vmatprep.subr.mxu0 0.0
          %883 = vmatpush1.msra.mxu0 0.0
          %884 = vmatprep.subr.mxu0 0.0
          %885 = vmatpush1.msra.mxu0 0.0
          %886 = vmatprep.subr.mxu0 0.0
          %887 = vmatpush1.msra.mxu0 0.0
          %888 = vmatprep.subr.mxu0 0.0
          %889 = vmatpush1.msra.mxu0 0.0
          %890 = vmatprep.subr.mxu0 0.0
          %891 = vmatpush1.msra.mxu0 0.0
          %892 = vmatprep.subr.mxu0 0.0
          %893 = vmatpush1.msra.mxu0 0.0
          %894 = vmatprep.mubr.f32.mxu0 0.0
          %895 = vmatmul.mubr.f32.gmra.mrb[0].mxu0 %v688
          %v896 = vpop.f32.mrb[0].mxu0
          %v897 = vadd.f32 %v827, %v896
          %v898 = vpop.f32.mrb[0].mxu0
          %899 = vdwg.mxu0
          %v900 = vmax.f32 %v897, 0.0
          %v901 = vld [vmem:[%s5] sm:$0xff]
          %v902 = vld [vmem:[%s5 + $0x8] sm:$0xff]
          %v903 = vld [vmem:[%s5 + $0x10] sm:$0xff]
          %v904 = vld [vmem:[%s5 + $0x18] sm:$0xff]
          %v905 = vld [vmem:[%s5 + $0x20] sm:$0xff]
          %v906 = vld [vmem:[%s5 + $0x28] sm:$0xff]
          %v907 = vld [vmem:[%s5 + $0x30] sm:$0xff]
          %v908 = vld [vmem:[%s5 + $0x38] sm:$0xff]
          %v909 = vld [vmem:[%s6] sm:$0x1]
          %vm910 = vcmask 523264
          %v912 = vsel %vm910, %v900, 0
          %914 = vmatprep.subr.mxu0 0.0
          %915 = vmatpush1.msra.mxu0 %v901
          %916 = vmatprep.subr.mxu0 0.0
          %917 = vmatpush1.msra.mxu0 %v902
          %918 = vmatprep.subr.mxu0 0.0
          %919 = vmatpush1.msra.mxu0 %v903
          %920 = vmatprep.subr.mxu0 0.0
          %921 = vmatpush1.msra.mxu0 %v904
          %922 = vmatprep.subr.mxu0 0.0
          %923 = vmatpush1.msra.mxu0 %v905
          %924 = vmatprep.subr.mxu0 0.0
          %925 = vmatpush1.msra.mxu0 %v906
          %926 = vmatprep.subr.mxu0 0.0
          %927 = vmatpush1.msra.mxu0 %v907
          %928 = vmatprep.subr.mxu0 0.0
          %929 = vmatpush1.msra.mxu0 %v908
          %930 = vmatprep.subr.mxu0 0.0
          %931 = vmatpush1.msra.mxu0 0.0
          %932 = vmatprep.subr.mxu0 0.0
          %933 = vmatpush1.msra.mxu0 0.0
          %934 = vmatprep.subr.mxu0 0.0
          %935 = vmatpush1.msra.mxu0 0.0
          %936 = vmatprep.subr.mxu0 0.0
          %937 = vmatpush1.msra.mxu0 0.0
          %938 = vmatprep.subr.mxu0 0.0
          %939 = vmatpush1.msra.mxu0 0.0
          %940 = vmatprep.subr.mxu0 0.0
          %941 = vmatpush1.msra.mxu0 0.0
          %942 = vmatprep.subr.mxu0 0.0
          %943 = vmatpush1.msra.mxu0 0.0
          %944 = vmatprep.subr.mxu0 0.0
          %945 = vmatpush1.msra.mxu0 0.0
          %946 = vmatprep.subr.mxu0 0.0
          %947 = vmatpush1.msra.mxu0 0.0
          %948 = vmatprep.subr.mxu0 0.0
          %949 = vmatpush1.msra.mxu0 0.0
          %950 = vmatprep.subr.mxu0 0.0
          %951 = vmatpush1.msra.mxu0 0.0
          %952 = vmatprep.subr.mxu0 0.0
          %953 = vmatpush1.msra.mxu0 0.0
          %954 = vmatprep.subr.mxu0 0.0
          %955 = vmatpush1.msra.mxu0 0.0
          %956 = vmatprep.subr.mxu0 0.0
          %957 = vmatpush1.msra.mxu0 0.0
          %958 = vmatprep.subr.mxu0 0.0
          %959 = vmatpush1.msra.mxu0 0.0
          %960 = vmatprep.subr.mxu0 0.0
          %961 = vmatpush1.msra.mxu0 0.0
          %962 = vmatprep.subr.mxu0 0.0
          %963 = vmatpush1.msra.mxu0 0.0
          %964 = vmatprep.subr.mxu0 0.0
          %965 = vmatpush1.msra.mxu0 0.0
          %966 = vmatprep.subr.mxu0 0.0
          %967 = vmatpush1.msra.mxu0 0.0
          %968 = vmatprep.subr.mxu0 0.0
          %969 = vmatpush1.msra.mxu0 0.0
          %970 = vmatprep.subr.mxu0 0.0
          %971 = vmatpush1.msra.mxu0 0.0
          %972 = vmatprep.subr.mxu0 0.0
          %973 = vmatpush1.msra.mxu0 0.0
          %974 = vmatprep.subr.mxu0 0.0
          %975 = vmatpush1.msra.mxu0 0.0
          %976 = vmatprep.subr.mxu0 0.0
          %977 = vmatpush1.msra.mxu0 0.0
          %978 = vmatprep.mubr.f32.mxu0 0.0
          %979 = vmatmul.mubr.f32.gmra.mrb[0].mxu0 %v912
          %v980 = vpop.f32.mrb[0].mxu0
          %v981 = vadd.f32 %v909, %v980
          %v982 = vpop.f32.mrb[0].mxu0
          %983 = vdwg.mxu0
          %984 = vst [vmem:[%s290] sm:$0x1] %v981
        $region56: #{tpu_custom_call.1} parent=47 // pred_fallthru
          _
        %s985 = sand.u32 %s195, 1
        %s986 = scalar_lea.sflag [#allocation4], %s985
        %s987 = sand.u32 %s195, 1
        %s988 = scalar_lea.vmem [#allocation3], %s987
        // Predicated region
        $region57: #{tpu_custom_call.1} parent=47 // pred_check
          %p989 = pneg %p205
        $region58: #{tpu_custom_call.1} parent=47 // pred_check_branch
          %991 = sbr.rel (%p989) target = $region60
        $region59: #{tpu_custom_call.1} parent=47 // pred_region
          %s993 = ssub.s32 16, 16
          %994 = vsyncadd %s986, %s993
          %s995 = smul.addr %s25, 16
          %s996 = scalar_lea.hbm %s7, %s995
          %s998 = sshll.u32 %s988, 4
          %s999 = int_to_ptr.vmem [resolvable:$true] %s998
          %1001 = dma.vmem_to_hbm [thread:$0]  %s999, 16, %s996, %s986
        $region60: #{tpu_custom_call.1} parent=47 // pred_fallthru
          _
      $region48: #{tpu_custom_call.1} parent=5 // pred_fallthru
        _
      %p1002 = scmp.le.s32.totalorder 2, %s16
      // Predicated region
      $region61: #{tpu_custom_call.1} parent=5 // pred_check
        %p1003 = pneg %p1002
      $region62: #{tpu_custom_call.1} parent=5 // pred_check_branch
        %1005 = sbr.rel (%p1003) target = $region64
      $region63: #{tpu_custom_call.1} parent=5 // pred_region
        %s1006 = ssub.s32 %s16, 2
        // Predicated region
        $region65: #{tpu_custom_call.1} parent=63 // pred_check
          %p1007 = pneg %p211
        $region66: #{tpu_custom_call.1} parent=63 // pred_check_branch
          %1009 = sbr.rel (%p1007) target = $region68
        $region67: #{tpu_custom_call.1} parent=63 // pred_region
          %s1010 = sand.u32 %s196, 1
          %s1011 = scalar_lea.sflag [#allocation4], %s1010
          %s1012 = sand.u32 %s196, 1
          %s1013 = scalar_lea.vmem [#allocation3], %s1012
          %1014 = dma.done %s1011, 16
        $region68: #{tpu_custom_call.1} parent=63 // pred_fallthru
          _
      $region64: #{tpu_custom_call.1} parent=5 // pred_fallthru
        _
    $region6: #{tpu_custom_call.1} parent=1 // loop_footer
      %s20 = sadd.s32 1, %s16
    $region7: #{tpu_custom_call.1} parent=1 // loop_footer_branch
      %15 = sbr.rel target = $region3
    $region8: #{tpu_custom_call.1} parent=1 // loop_exit
      _
    %1015 = vsyncpa [#allocation4], 1
    %s1016 = scalar_lea.sflag [#allocation4], 1
    %1017 = vsyncpa %s1016, 1

</llo_original>
